<compile_context>
chip_gen: v5e
topology: v5e:2x2
jax: 0.10.0
libtpu: 0.0.40
codegen_flags: <defaults>
</compile_context>

<pallas_src>
import jax
import jax.numpy as jnp
from jax.experimental import pallas as pl
from jax.experimental.pallas import tpu as pltpu


def _prompt_dma_copy_kernel(prompt_hbm_ref, out_hbm_ref):
    """Single HBM->HBM DMA: copy the whole prompt into the output buffer."""

    def body(sem):
        cp = pltpu.make_async_copy(prompt_hbm_ref, out_hbm_ref, sem)
        cp.start()
        cp.wait()

    pl.run_scoped(body, pltpu.SemaphoreType.DMA(()))


def token_prompter_forward(prompt: jax.Array, *, materialize: bool = False) -> jax.Array:
    """Pallas equivalent of TokenPrompter.forward().

    prompt: [1, prompt_len, 768]

    materialize=False (default, matches the nn.Module): return the parameter
    unchanged -- no data movement, no kernel.
    materialize=True: return a freshly-allocated copy produced by a single
    HBM->HBM DMA (runs at DMA/HBM roofline on all generations).
    """
    if not materialize:
        return prompt

    nbytes = prompt.size * prompt.dtype.itemsize
    return pl.pallas_call(
        _prompt_dma_copy_kernel,
        out_shape=jax.ShapeDtypeStruct(prompt.shape, prompt.dtype),
        in_specs=[pl.BlockSpec(memory_space=pl.ANY)],
        out_specs=pl.BlockSpec(memory_space=pl.ANY),
        cost_estimate=pl.CostEstimate(
            flops=0, transcendentals=0, bytes_accessed=2 * nbytes
        ),
    )(prompt)


class TokenPrompter:
    """JAX/Pallas port of the PyTorch TokenPrompter module."""

    def __init__(self, prompt_len: int, key: jax.Array):
        # nn.Parameter(torch.randn([1, prompt_len, 768])) -> standard normal init
        self.prompt = jax.random.normal(key, (1, prompt_len, 768), dtype=jnp.float32)

    def __call__(self, materialize: bool = False) -> jax.Array:
        # forward() returns the parameter unchanged: zero data movement.
        return token_prompter_forward(self.prompt, materialize=materialize)


if __name__ == "__main__":
    key = jax.random.PRNGKey(0)

    prompt_len = 8
    module = TokenPrompter(prompt_len, key)

    # Hot path (matches nn.Module.forward): identity return, no kernel launch.
    fast = module()
    assert fast is module.prompt

    # Materialized path: single HBM->HBM DMA producing a distinct buffer.
    out = module(materialize=True)
    out = jax.block_until_ready(out)
    assert out.shape == (1, prompt_len, 768), out.shape
    assert out.dtype == jnp.float32, out.dtype
    assert bool(jnp.array_equal(out, module.prompt))

    # Exercise a larger prompt to confirm the same (grid-free, VMEM-free) path
    # handles arbitrary sizes without per-generation tuning.
    module2 = TokenPrompter(2048, jax.random.PRNGKey(1))
    out2 = jax.block_until_ready(module2(materialize=True))
    assert out2.shape == (1, 2048, 768), out2.shape
    assert bool(jnp.array_equal(out2, module2.prompt))

    print("KERNEL_OK")
</pallas_src>

<mosaic_0001>
module attributes {stable_mosaic.version = 11 : i64} {
  func.func @_prompt_dma_copy_kernel(%arg0: memref<1x8x768xf32, #tpu.memory_space<any>>, %arg1: memref<1x8x768xf32, #tpu.memory_space<any>>) attributes {dimension_semantics = [], scalar_prefetch = 0 : i64, scratch_operands = 0 : i64, tpu.core_type = #tpu.core_type<tc>} {
    "tpu.region"() ({
      %0 = tpu.sem_alloc : memref<!tpu.dma_semaphore, #tpu.memory_space<semaphore_mem>>
      tpu.enqueue_dma source(%arg0 : memref<1x8x768xf32, #tpu.memory_space<any>>) target(%arg1 : memref<1x8x768xf32, #tpu.memory_space<any>>) target_semaphore(%0 : memref<!tpu.dma_semaphore, #tpu.memory_space<semaphore_mem>>)
      tpu.wait_dma2 semaphore(%0 : memref<!tpu.dma_semaphore, #tpu.memory_space<semaphore_mem>>) src(%arg0 : memref<1x8x768xf32, #tpu.memory_space<any>>) dst(%arg1 : memref<1x8x768xf32, #tpu.memory_space<any>>)
      tpu.yield
    }) : () -> ()
    return
  }
}

</mosaic_0001>

<llo_original>
// kernel: tpu_custom_call.1
$region0: #{tpu_custom_call.1}
  #allocation0 [shape = 'u32[]', space=smem, size = 0x4, offset = 0x4, fixed_abs, tag = 'smem constant byte address 0x4 - core index']
  #allocation1 [shape = 'u32[72,128]{1,0:T(1,128)}', space=vmem, size = 0x9000, scoped, tag = 'internal scratch']
  #allocation3 [shape = 's32[]', space=sflag, size = 0x4, offset = 0, fixed_abs, tag = 'sflag constant byte address 0x0 - dummy sync flag']
  #allocation4 [shape = 'u32[0]{0}', space=smem, size = 0, offset = 0, fixed_abs, tag = 'smem constant byte address 0x0 - null']
  %s0 = inlined_call_operand.hbm [shape: f32[1,8,768], index: 0, kind: input, shape index: {}]
  %s1 = inlined_call_operand.hbm [shape: f32[1,8,768], index: 1, kind: output, shape index: {}]
  %s2 = sld [smem:[#allocation0]]
  $region3: #{tpu_custom_call.1} parent=0
    _
  %s4 = ssub.s32 1, %s2
  %s5 = scalar_select 0, %s4, %s2
  $region2: #{tpu_custom_call.1} parent=0
    #allocation2 [shape = 's32[1]{0}', space=sflag, size = 0x4, scoped, tag = 'scoped memory for tpu_custom_call.1']
    %s7 = sshll.u32 1, 14
    %s8 = sxor.u32 4294967295, %s7
    %s10 = sshll.u32 %s0, 4
    %s11 = int_to_ptr.hbm [resolvable:$true] %s10
    %s12 = sshll.u32 %s1, 4
    %s13 = int_to_ptr.hbm [resolvable:$true] %s12
    %16 = dma.general %s11, 768, %s13, [#allocation2], [#allocation3], [#allocation4], 0, 0
    %s17 = smul.u32 8, 1
    %s18 = smul.u32 %s17, 1
    %s19 = smul.u32 %s18, 6
    %s20 = sshll.u32 %s19, 4
    %21 = dma.done [#allocation2], %s20

</llo_original>
